<compile_context>
chip_gen: v7x
topology: tpu7x:2x2x1
jax: 0.10.0
libtpu: 0.0.40
codegen_flags: <defaults>
</compile_context>

<pallas_src>
from functools import partial

import jax
import jax.numpy as jnp
from jax.experimental import pallas as pl
from jax.experimental.pallas import tpu as pltpu


_TT = 128                 # in-register transpose tile: 128x128 f32 = 16 vregs
_BLOCK_BUDGET = 4 << 20   # target bytes per (unpadded) block
_MAX_PIECES = 64          # cap on unrolled 128x128 transposes per grid step


def _relayout_kernel(x_ref, o_ref):
    """x_ref (1, tc, thw) -> o_ref (1, thw, tc): tiled 2-D transpose.

    Static <=128x128 pieces; piece count is bounded by the tile picker, and
    each piece is consumed by its store immediately (no long live ranges)."""
    tc = x_ref.shape[1]
    thw = x_ref.shape[2]
    for cs in range(0, tc, _TT):
        ce = min(cs + _TT, tc)
        for ks in range(0, thw, _TT):
            ke = min(ks + _TT, thw)
            o_ref[0, ks:ke, cs:ce] = x_ref[0, cs:ce, ks:ke].T


def _pick_tiles(C, HW, itemsize):
    """Choose (tc, thw): tc | C, thw | HW, blocks legal, <=budget, <=64 pieces.

    Preference (per perf review):
      1) tc == C  -> each output block is a fully contiguous HBM slab.
      2) Largest thw (128-multiple divisor of H*W) fitting budget + piece cap.
      3) Only if tc == C cannot fit, fall back to the largest 128-multiple
         divisor of C (still lane-dense writeback, 128+-wide bursts).
    """
    thw_cands = sorted(
        [d for d in range(_TT, HW + 1, _TT) if HW % d == 0], reverse=True
    ) or [HW]
    tc_cands = [C] + sorted(
        [d for d in range(_TT, C, _TT) if C % d == 0], reverse=True
    )

    def pieces(tc, thw):
        return (-(-tc // _TT)) * (-(-thw // _TT))

    for tc in tc_cands:
        for thw in thw_cands:
            if tc * thw * itemsize <= _BLOCK_BUDGET and pieces(tc, thw) <= _MAX_PIECES:
                return tc, thw
    return tc_cands[-1], thw_cands[-1]    # pathological shapes: smallest legal


def _padded_vmem_bytes(sub, lane, itemsize):
    """VMEM footprint of a (sub, lane) f32/bf16 tile after (8,128) padding."""
    return (-(-sub // 8) * 8) * (-(-lane // 128) * 128) * itemsize


@partial(jax.jit, static_argnames=("D",))
def feature2embedding(x, D):
    """x: [B, C, H, W] -> [-1, 512, D]  (== x.permute(0,2,3,1).reshape(-1,512,D))."""
    B, C, H, W = x.shape
    HW = H * W
    itemsize = jnp.dtype(x.dtype).itemsize
    assert (B * C * HW) % (512 * D) == 0, "input size must factor into (-1, 512, D)"

    x2 = x.reshape(B, C, HW)              # metadata-only (NCHW is contiguous)

    tc, thw = _pick_tiles(C, HW, itemsize)
    grid = (B, HW // thw, C // tc)        # exact: tc | C and thw | HW

    # Explicit VMEM bound: double-buffered (in + out) padded blocks + headroom.
    vmem_limit = max(
        int(2 * (_padded_vmem_bytes(tc, thw, itemsize)
                 + _padded_vmem_bytes(thw, tc, itemsize)) + (8 << 20)),
        16 << 20)

    nhwc = pl.pallas_call(
        _relayout_kernel,
        out_shape=jax.ShapeDtypeStruct((B, HW, C), x.dtype),
        grid_spec=pltpu.PrefetchScalarGridSpec(
            num_scalar_prefetch=0,
            grid=grid,
            in_specs=[pl.BlockSpec((1, tc, thw), lambda b, j, i: (b, i, j))],
            out_specs=pl.BlockSpec((1, thw, tc), lambda b, j, i: (b, j, i)),
        ),
        compiler_params=pltpu.CompilerParams(
            dimension_semantics=("parallel", "parallel", "parallel"),
            vmem_limit_bytes=vmem_limit,
        ),
        cost_estimate=pl.CostEstimate(
            flops=0,
            transcendentals=0,
            bytes_accessed=2 * B * C * HW * itemsize),
    )(x2)

    # Metadata-only reshape: (B, H*W, C) is contiguous NHWC byte order.
    return nhwc.reshape(-1, 512, D)


def feature2embedding_ref(x, D):
    # Pure-JAX reference matching the PyTorch module exactly.
    return jnp.transpose(x, (0, 2, 3, 1)).reshape(-1, 512, D)


if __name__ == "__main__":
    key = jax.random.PRNGKey(0)
    k1, k2 = jax.random.split(key)

    # Case 1: lane-sized channel count (C == D == 128).
    #   Picker: tc = C = 128, thw = 1024 -> grid (2, 1, 1), 8 transpose tiles,
    #   fully contiguous 512 KiB writeback slabs; output (4, 512, 128).
    B, C, H, W = 2, 128, 32, 32
    D = 128
    x1 = jax.random.normal(k1, (B, C, H, W), dtype=jnp.float32)
    out1 = jax.block_until_ready(feature2embedding(x1, D))
    ref1 = feature2embedding_ref(x1, D)
    assert out1.shape == (B * H * W * C // (512 * D), 512, D), out1.shape
    assert bool(jnp.array_equal(out1, ref1)), "mismatch vs reference (case 1)"

    # Case 2: small / non-128 channel count (C == D == 32).
    #   Picker: tc = C = 32 (legal: equals full array dim -> contiguous
    #   writeback), thw = 256 -> grid (2, 1, 1); output (1, 512, 32).
    #   Bit-exact: no MXU / no one-hot matmuls on this path anymore.
    B, C, H, W = 2, 32, 16, 16
    D = 32
    x2 = jax.random.normal(k2, (B, C, H, W), dtype=jnp.float32)
    out2 = jax.block_until_ready(feature2embedding(x2, D))
    ref2 = feature2embedding_ref(x2, D)
    assert out2.shape == (B * H * W * C // (512 * D), 512, D), out2.shape
    assert bool(jnp.array_equal(out2, ref2)), "mismatch vs reference (case 2)"

    print("KERNEL_OK")
</pallas_src>

<mosaic_0001>
module attributes {stable_mosaic.version = 11 : i64} {
  func.func @_relayout_kernel(%arg0: i32, %arg1: i32, %arg2: i32, %arg3: memref<1x128x1024xf32, #tpu.memory_space<vmem>>, %arg4: memref<1x1024x128xf32, #tpu.memory_space<vmem>>) attributes {dimension_semantics = [#tpu.dimension_semantics<parallel>, #tpu.dimension_semantics<parallel>, #tpu.dimension_semantics<parallel>], iteration_bounds = array<i64: 2, 1, 1>, scalar_prefetch = 0 : i64, scratch_operands = 0 : i64, tpu.core_type = #tpu.core_type<tc>, window_params = [{transform_indices = @transform_0, window_bounds = array<i64: 1, 128, 1024>}, {transform_indices = @transform_1, window_bounds = array<i64: 1, 1024, 128>}]} {
    %c0 = arith.constant 0 : index
    %c0_0 = arith.constant 0 : index
    %c0_1 = arith.constant 0 : index
    %0 = vector.load %arg3[%c0, %c0_0, %c0_1] : memref<1x128x1024xf32, #tpu.memory_space<vmem>>, vector<1x128x128xf32>
    %1 = vector.shape_cast %0 : vector<1x128x128xf32> to vector<128x128xf32>
    %2 = tpu.transpose %1, [1, 0] : vector<128x128xf32> -> vector<128x128xf32>
    %c0_2 = arith.constant 0 : index
    %c0_3 = arith.constant 0 : index
    %c0_4 = arith.constant 0 : index
    %3 = vector.load %arg4[%c0_2, %c0_3, %c0_4] : memref<1x1024x128xf32, #tpu.memory_space<vmem>>, vector<1x128x128xf32>
    %4 = vector.shape_cast %3 : vector<1x128x128xf32> to vector<128x128xf32>
    %5 = vector.shape_cast %2 : vector<128x128xf32> to vector<1x128x128xf32>
    tpu.vector_store %arg4[%c0_2, %c0_3, %c0_4], %5 {strides = array<i32>} : memref<1x1024x128xf32, #tpu.memory_space<vmem>>, vector<1x128x128xf32>,
    %c0_5 = arith.constant 0 : index
    %c0_6 = arith.constant 0 : index
    %c128 = arith.constant 128 : index
    %6 = vector.load %arg3[%c0_5, %c0_6, %c128] : memref<1x128x1024xf32, #tpu.memory_space<vmem>>, vector<1x128x128xf32>
    %7 = vector.shape_cast %6 : vector<1x128x128xf32> to vector<128x128xf32>
    %8 = tpu.transpose %7, [1, 0] : vector<128x128xf32> -> vector<128x128xf32>
    %c0_7 = arith.constant 0 : index
    %c128_8 = arith.constant 128 : index
    %c0_9 = arith.constant 0 : index
    %9 = vector.load %arg4[%c0_7, %c128_8, %c0_9] : memref<1x1024x128xf32, #tpu.memory_space<vmem>>, vector<1x128x128xf32>
    %10 = vector.shape_cast %9 : vector<1x128x128xf32> to vector<128x128xf32>
    %11 = vector.shape_cast %8 : vector<128x128xf32> to vector<1x128x128xf32>
    tpu.vector_store %arg4[%c0_7, %c128_8, %c0_9], %11 {strides = array<i32>} : memref<1x1024x128xf32, #tpu.memory_space<vmem>>, vector<1x128x128xf32>,
    %c0_10 = arith.constant 0 : index
    %c0_11 = arith.constant 0 : index
    %c256 = arith.constant 256 : index
    %12 = vector.load %arg3[%c0_10, %c0_11, %c256] : memref<1x128x1024xf32, #tpu.memory_space<vmem>>, vector<1x128x128xf32>
    %13 = vector.shape_cast %12 : vector<1x128x128xf32> to vector<128x128xf32>
    %14 = tpu.transpose %13, [1, 0] : vector<128x128xf32> -> vector<128x128xf32>
    %c0_12 = arith.constant 0 : index
    %c256_13 = arith.constant 256 : index
    %c0_14 = arith.constant 0 : index
    %15 = vector.load %arg4[%c0_12, %c256_13, %c0_14] : memref<1x1024x128xf32, #tpu.memory_space<vmem>>, vector<1x128x128xf32>
    %16 = vector.shape_cast %15 : vector<1x128x128xf32> to vector<128x128xf32>
    %17 = vector.shape_cast %14 : vector<128x128xf32> to vector<1x128x128xf32>
    tpu.vector_store %arg4[%c0_12, %c256_13, %c0_14], %17 {strides = array<i32>} : memref<1x1024x128xf32, #tpu.memory_space<vmem>>, vector<1x128x128xf32>,
    %c0_15 = arith.constant 0 : index
    %c0_16 = arith.constant 0 : index
    %c384 = arith.constant 384 : index
    %18 = vector.load %arg3[%c0_15, %c0_16, %c384] : memref<1x128x1024xf32, #tpu.memory_space<vmem>>, vector<1x128x128xf32>
    %19 = vector.shape_cast %18 : vector<1x128x128xf32> to vector<128x128xf32>
    %20 = tpu.transpose %19, [1, 0] : vector<128x128xf32> -> vector<128x128xf32>
    %c0_17 = arith.constant 0 : index
    %c384_18 = arith.constant 384 : index
    %c0_19 = arith.constant 0 : index
    %21 = vector.load %arg4[%c0_17, %c384_18, %c0_19] : memref<1x1024x128xf32, #tpu.memory_space<vmem>>, vector<1x128x128xf32>
    %22 = vector.shape_cast %21 : vector<1x128x128xf32> to vector<128x128xf32>
    %23 = vector.shape_cast %20 : vector<128x128xf32> to vector<1x128x128xf32>
    tpu.vector_store %arg4[%c0_17, %c384_18, %c0_19], %23 {strides = array<i32>} : memref<1x1024x128xf32, #tpu.memory_space<vmem>>, vector<1x128x128xf32>,
    %c0_20 = arith.constant 0 : index
    %c0_21 = arith.constant 0 : index
    %c512 = arith.constant 512 : index
    %24 = vector.load %arg3[%c0_20, %c0_21, %c512] : memref<1x128x1024xf32, #tpu.memory_space<vmem>>, vector<1x128x128xf32>
    %25 = vector.shape_cast %24 : vector<1x128x128xf32> to vector<128x128xf32>
    %26 = tpu.transpose %25, [1, 0] : vector<128x128xf32> -> vector<128x128xf32>
    %c0_22 = arith.constant 0 : index
    %c512_23 = arith.constant 512 : index
    %c0_24 = arith.constant 0 : index
    %27 = vector.load %arg4[%c0_22, %c512_23, %c0_24] : memref<1x1024x128xf32, #tpu.memory_space<vmem>>, vector<1x128x128xf32>
    %28 = vector.shape_cast %27 : vector<1x128x128xf32> to vector<128x128xf32>
    %29 = vector.shape_cast %26 : vector<128x128xf32> to vector<1x128x128xf32>
    tpu.vector_store %arg4[%c0_22, %c512_23, %c0_24], %29 {strides = array<i32>} : memref<1x1024x128xf32, #tpu.memory_space<vmem>>, vector<1x128x128xf32>,
    %c0_25 = arith.constant 0 : index
    %c0_26 = arith.constant 0 : index
    %c640 = arith.constant 640 : index
    %30 = vector.load %arg3[%c0_25, %c0_26, %c640] : memref<1x128x1024xf32, #tpu.memory_space<vmem>>, vector<1x128x128xf32>
    %31 = vector.shape_cast %30 : vector<1x128x128xf32> to vector<128x128xf32>
    %32 = tpu.transpose %31, [1, 0] : vector<128x128xf32> -> vector<128x128xf32>
    %c0_27 = arith.constant 0 : index
    %c640_28 = arith.constant 640 : index
    %c0_29 = arith.constant 0 : index
    %33 = vector.load %arg4[%c0_27, %c640_28, %c0_29] : memref<1x1024x128xf32, #tpu.memory_space<vmem>>, vector<1x128x128xf32>
    %34 = vector.shape_cast %33 : vector<1x128x128xf32> to vector<128x128xf32>
    %35 = vector.shape_cast %32 : vector<128x128xf32> to vector<1x128x128xf32>
    tpu.vector_store %arg4[%c0_27, %c640_28, %c0_29], %35 {strides = array<i32>} : memref<1x1024x128xf32, #tpu.memory_space<vmem>>, vector<1x128x128xf32>,
    %c0_30 = arith.constant 0 : index
    %c0_31 = arith.constant 0 : index
    %c768 = arith.constant 768 : index
    %36 = vector.load %arg3[%c0_30, %c0_31, %c768] : memref<1x128x1024xf32, #tpu.memory_space<vmem>>, vector<1x128x128xf32>
    %37 = vector.shape_cast %36 : vector<1x128x128xf32> to vector<128x128xf32>
    %38 = tpu.transpose %37, [1, 0] : vector<128x128xf32> -> vector<128x128xf32>
    %c0_32 = arith.constant 0 : index
    %c768_33 = arith.constant 768 : index
    %c0_34 = arith.constant 0 : index
    %39 = vector.load %arg4[%c0_32, %c768_33, %c0_34] : memref<1x1024x128xf32, #tpu.memory_space<vmem>>, vector<1x128x128xf32>
    %40 = vector.shape_cast %39 : vector<1x128x128xf32> to vector<128x128xf32>
    %41 = vector.shape_cast %38 : vector<128x128xf32> to vector<1x128x128xf32>
    tpu.vector_store %arg4[%c0_32, %c768_33, %c0_34], %41 {strides = array<i32>} : memref<1x1024x128xf32, #tpu.memory_space<vmem>>, vector<1x128x128xf32>,
    %c0_35 = arith.constant 0 : index
    %c0_36 = arith.constant 0 : index
    %c896 = arith.constant 896 : index
    %42 = vector.load %arg3[%c0_35, %c0_36, %c896] : memref<1x128x1024xf32, #tpu.memory_space<vmem>>, vector<1x128x128xf32>
    %43 = vector.shape_cast %42 : vector<1x128x128xf32> to vector<128x128xf32>
    %44 = tpu.transpose %43, [1, 0] : vector<128x128xf32> -> vector<128x128xf32>
    %c0_37 = arith.constant 0 : index
    %c896_38 = arith.constant 896 : index
    %c0_39 = arith.constant 0 : index
    %45 = vector.load %arg4[%c0_37, %c896_38, %c0_39] : memref<1x1024x128xf32, #tpu.memory_space<vmem>>, vector<1x128x128xf32>
    %46 = vector.shape_cast %45 : vector<1x128x128xf32> to vector<128x128xf32>
    %47 = vector.shape_cast %44 : vector<128x128xf32> to vector<1x128x128xf32>
    tpu.vector_store %arg4[%c0_37, %c896_38, %c0_39], %47 {strides = array<i32>} : memref<1x1024x128xf32, #tpu.memory_space<vmem>>, vector<1x128x128xf32>,
    return
  }
  func.func @transform_0(%arg0: i32, %arg1: i32, %arg2: i32) -> (i32, i32, i32) {
    %c0_i32 = arith.constant 0 : i32
    return %arg0, %arg2, %arg1 : i32, i32, i32
  }
  func.func @transform_1(%arg0: i32, %arg1: i32, %arg2: i32) -> (i32, i32, i32) {
    %c0_i32 = arith.constant 0 : i32
    return %arg0, %arg1, %arg2 : i32, i32, i32
  }
}

</mosaic_0001>

<llo_original>
// kernel: feature2embedding.1
$region0: #{feature2embedding.1}
  #allocation0 [shape = 'u32[]', space=smem, size = 0x4, offset = 0x4, fixed_abs, tag = 'smem constant byte address 0x4 - core index']
  #allocation1 [shape = 'u32[144,128]{1,0:T(1,128)}', space=vmem, size = 0x12000, scoped, tag = 'internal scratch']
  %s0 = inlined_call_operand.vmem [shape: f32[2,128,1024], index: 0, kind: input, shape index: {}]
  %s1 = inlined_call_operand.hbm [shape: f32[2,1024,128], index: 1, kind: output, shape index: {}]
  %s2 = sld [smem:[#allocation0]]
  $region37: #{feature2embedding.1} parent=0
    _
  %s4 = ssub.s32 1, %s2
  %s5 = scalar_select 0, %s4, %s2
  $region1: #{feature2embedding.1} parent=0
    #allocation2 [shape = 'u8[1048576]{0}', space=vmem, size = 0x100000, scoped, tag = 'output window, operand 0']
    #allocation3 [shape = 's32[2]{0}', space=sflag, size = 0x8, scoped, tag = 'scoped memory for feature2embedding.1']
    %6 = vsyncpa [#allocation3], 0
    %s7 = scalar_lea.sflag [#allocation3], 1
    %8 = vsyncpa %s7, 0
    loop: start=0, step=1, limit=4
    $region2: #{feature2embedding.1} parent=1 // loop_pre_header
      _
    $region3: #{feature2embedding.1} parent=1 // loop_header
      %s10 = sphi 0, %s14
      %p11 = scmp.ge.s32.totalorder %s10, 4
      %s17 = sphi 0, %s36
      %s18 = sphi 0, %s32
      %s19 = sphi 0, %s28
      %s20 = sphi 0, %s17
      %s21 = sphi 0, %s18
      %s22 = sphi 0, %s19
      %s23 = sphi 0, %s20
      %s24 = sphi 0, %s21
      %s25 = sphi 0, %s22
      %s43 = sphi 0, %s45
      %s46 = sphi 0, %s43
      %s47 = sphi 0, %s46
      %s63 = sphi 0, %s47
      %s73 = sphi 0, %s75
      %s76 = sphi 0, %s73
      %s77 = sphi 0, %s76
      %s93 = sphi 0, %s77
    $region4: #{feature2embedding.1} parent=1 // loop_header_branch
      %13 = sbr.rel (%p11) target = $region8
    $region5: #{feature2embedding.1} parent=1 // loop_body
      %s15 = ssub.s32 %s10, 1
      %s16 = ssub.s32 %s10, 2
      %s26 = sadd.s32 1, %s19
      %p27 = scmp.ge.s32.totalorder %s26, 1
      %s28 = scalar_select %p27, 0, %s26
      %s29 = sadd.s32 1, %s18
      %s30 = scalar_select %p27, %s29, %s18
      %p31 = scmp.ge.s32.totalorder %s30, 1
      %s32 = scalar_select %p31, 0, %s30
      %s33 = sadd.s32 1, %s17
      %s34 = scalar_select %p31, %s33, %s17
      %p35 = scmp.ge.s32.totalorder %s34, 2
      %s36 = scalar_select %p35, 0, %s34
      %s37 = ssub.s32 %s17, %s36
      %s38 = ssub.s32 %s19, %s28
      %s39 = sor.u32 %s37, %s38
      %s40 = ssub.s32 %s18, %s32
      %s41 = sor.u32 %s39, %s40
      %p42 = scmp.eq.s32.totalorder %s41, 0
      %s44 = sadd.s32 %s43, 1
      %s45 = scalar_select %p42, %s43, %s44
      %p48 = pneg %p42
      %p49 = scmp.eq.s32.totalorder %s10, 1
      %p50 = por %p48, %p49
      %p51 = scmp.ne.s32.totalorder %s43, %s46
      %p52 = scmp.eq.s32.totalorder %s10, 0
      %p53 = por %p51, %p52
      %p54 = scmp.ne.s32.totalorder %s43, %s46
      %p55 = scmp.eq.s32.totalorder %s15, 1
      %p56 = por %p54, %p55
      %p57 = scmp.ne.s32.totalorder %s46, %s47
      %p58 = scmp.eq.s32.totalorder %s15, 0
      %p59 = por %p57, %p58
      %p60 = scmp.ne.s32.totalorder %s46, %s47
      %p61 = scmp.eq.s32.totalorder %s16, 1
      %p62 = por %p60, %p61
      %p64 = scmp.ne.s32.totalorder %s47, %s63
      %p65 = scmp.eq.s32.totalorder %s16, 0
      %p66 = por %p64, %p65
      %s67 = ssub.s32 %s17, %s36
      %s68 = ssub.s32 %s18, %s32
      %s69 = sor.u32 %s67, %s68
      %s70 = ssub.s32 %s19, %s28
      %s71 = sor.u32 %s69, %s70
      %p72 = scmp.eq.s32.totalorder %s71, 0
      %s74 = sadd.s32 %s73, 1
      %s75 = scalar_select %p72, %s73, %s74
      %p78 = pneg %p72
      %p79 = scmp.eq.s32.totalorder %s10, 1
      %p80 = por %p78, %p79
      %p81 = scmp.ne.s32.totalorder %s73, %s76
      %p82 = scmp.eq.s32.totalorder %s10, 0
      %p83 = por %p81, %p82
      %p84 = scmp.ne.s32.totalorder %s73, %s76
      %p85 = scmp.eq.s32.totalorder %s15, 1
      %p86 = por %p84, %p85
      %p87 = scmp.ne.s32.totalorder %s76, %s77
      %p88 = scmp.eq.s32.totalorder %s15, 0
      %p89 = por %p87, %p88
      %p90 = scmp.ne.s32.totalorder %s76, %s77
      %p91 = scmp.eq.s32.totalorder %s16, 1
      %p92 = por %p90, %p91
      %p94 = scmp.ne.s32.totalorder %s77, %s93
      %p95 = scmp.eq.s32.totalorder %s16, 0
      %p96 = por %p94, %p95
      %p97 = scmp.le.s32.totalorder 1, %s10
      %p98 = scmp.lt.s32.totalorder %s10, 3
      %p99 = pnand %p97, %p98
      %p100 = pneg %p99
      // Predicated region
      $region9: #{feature2embedding.1} parent=5 // pred_check
        _
      $region10: #{feature2embedding.1} parent=5 // pred_check_branch
        %102 = sbr.rel (%p99) target = $region12
      $region11: #{feature2embedding.1} parent=5 // pred_region
        %s103 = ssub.s32 %s10, 1
      $region12: #{feature2embedding.1} parent=5 // pred_fallthru
        _
      %p104 = scmp.lt.s32.totalorder %s10, 2
      // Predicated region
      $region13: #{feature2embedding.1} parent=5 // pred_check
        %p105 = pneg %p104
      $region14: #{feature2embedding.1} parent=5 // pred_check_branch
        %107 = sbr.rel (%p105) target = $region16
      $region15: #{feature2embedding.1} parent=5 // pred_region
        // Predicated region
        $region17: #{feature2embedding.1} parent=15 // pred_check
          %p108 = pneg %p53
        $region18: #{feature2embedding.1} parent=15 // pred_check_branch
          %110 = sbr.rel (%p108) target = $region20
        $region19: #{feature2embedding.1} parent=15 // pred_region
          %s111 = smul.u32 16, %s19
          %s112 = smul.u32 8, %s18
          %p113 = scmp.lt.s32.totalorder %s17, 1
          %s114 = scalar_select %p113, %s17, 1
          %p115 = scmp.lt.s32.totalorder %s111, 15
          %s116 = scalar_select %p115, %s111, 15
          %p117 = scmp.lt.s32.totalorder %s112, 7
          %s118 = scalar_select %p117, %s112, 7
          %s119 = smul.addr %s116, 8
          %s120 = sadd.s32 %s118, %s119
          %s121 = smul.addr %s114, 128
          %s122 = sadd.s32 %s120, %s121
          %s123 = smul.addr %s122, 8
          %s124 = scalar_lea.vmem %s0, %s123
          %s125 = smul.u32 16, %s19
          %s126 = smul.u32 8, %s18
        $region20: #{feature2embedding.1} parent=15 // pred_fallthru
          _
      $region16: #{feature2embedding.1} parent=5 // pred_fallthru
        _
      %p127 = scmp.le.s32.totalorder 1, %s10
      %p128 = scmp.lt.s32.totalorder %s10, 3
      %p129 = pnand %p127, %p128
      %p130 = pneg %p129
      // Predicated region
      $region21: #{feature2embedding.1} parent=5 // pred_check
        _
      $region22: #{feature2embedding.1} parent=5 // pred_check_branch
        %132 = sbr.rel (%p129) target = $region24
      $region23: #{feature2embedding.1} parent=5 // pred_region
        %s133 = ssub.s32 %s10, 1
        %s134 = smul.u32 16, %s22
        %s135 = smul.u32 8, %s21
        %p136 = scmp.lt.s32.totalorder %s20, 1
        %s137 = scalar_select %p136, %s20, 1
        %p138 = scmp.lt.s32.totalorder %s134, 15
        %s139 = scalar_select %p138, %s134, 15
        %p140 = scmp.lt.s32.totalorder %s135, 7
        %s141 = scalar_select %p140, %s135, 7
        %s142 = smul.addr %s139, 8
        %s143 = sadd.s32 %s141, %s142
        %s144 = smul.addr %s137, 128
        %s145 = sadd.s32 %s143, %s144
        %s146 = smul.addr %s145, 8
        %s147 = scalar_lea.vmem %s0, %s146
        %p148 = pneg %p59
        %p149 = pneg %p56
        %p150 = pneg %p89
        %p151 = pneg %p86
        %s152 = sand.u32 %s76, 1
        %s153 = scalar_lea.sflag [#allocation3], %s152
        %s154 = sand.u32 %s76, 1
        %s155 = smul.addr %s154, 1024
        %s156 = scalar_lea.vmem [#allocation2], %s155
        %s157 = smul.u32 16, %s22
        %s158 = smul.u32 8, %s21
        %p159 = scmp.lt.s32.totalorder %s20, 1
        %s160 = scalar_select %p159, %s20, 1
        %p161 = scmp.lt.s32.totalorder %s157, 15
        %s162 = scalar_select %p161, %s157, 15
        %p163 = scmp.lt.s32.totalorder %s158, 7
        %s164 = scalar_select %p163, %s158, 7
        %s165 = smul.addr %s162, 8
        %s166 = sadd.s32 %s164, %s165
        %s167 = smul.addr %s160, 128
        %s168 = sadd.s32 %s166, %s167
        %s169 = smul.addr %s168, 8
        %s170 = scalar_lea.vmem %s0, %s169
        %s171 = smul.u32 16, %s22
        %s172 = smul.u32 8, %s21
        %s173 = smul.u32 128, %s21
        %v174 = vld [vmem:[%s170] sm:$0xff]
        %v175 = vld [vmem:[%s170 + $0x40] sm:$0xff]
        %v176 = vld [vmem:[%s170 + $0x80] sm:$0xff]
        %v177 = vld [vmem:[%s170 + $0xc0] sm:$0xff]
        %v178 = vld [vmem:[%s170 + $0x100] sm:$0xff]
        %v179 = vld [vmem:[%s170 + $0x140] sm:$0xff]
        %v180 = vld [vmem:[%s170 + $0x180] sm:$0xff]
        %v181 = vld [vmem:[%s170 + $0x1c0] sm:$0xff]
        %v182 = vld [vmem:[%s170 + $0x200] sm:$0xff]
        %v183 = vld [vmem:[%s170 + $0x240] sm:$0xff]
        %v184 = vld [vmem:[%s170 + $0x280] sm:$0xff]
        %v185 = vld [vmem:[%s170 + $0x2c0] sm:$0xff]
        %v186 = vld [vmem:[%s170 + $0x300] sm:$0xff]
        %v187 = vld [vmem:[%s170 + $0x340] sm:$0xff]
        %v188 = vld [vmem:[%s170 + $0x380] sm:$0xff]
        %v189 = vld [vmem:[%s170 + $0x3c0] sm:$0xff]
        %190 = vxpose.xlu0.b32.start [1/16] %v174, 128
        %191 = vxpose.xlu0.b32.cont [2/16] %v175, 128
        %192 = vxpose.xlu0.b32.cont [3/16] %v176, 128
        %193 = vxpose.xlu0.b32.cont [4/16] %v177, 128
        %194 = vxpose.xlu0.b32.cont [5/16] %v178, 128
        %195 = vxpose.xlu0.b32.cont [6/16] %v179, 128
        %196 = vxpose.xlu0.b32.cont [7/16] %v180, 128
        %197 = vxpose.xlu0.b32.cont [8/16] %v181, 128
        %198 = vxpose.xlu0.b32.cont [9/16] %v182, 128
        %199 = vxpose.xlu0.b32.cont [10/16] %v183, 128
        %200 = vxpose.xlu0.b32.cont [11/16] %v184, 128
        %201 = vxpose.xlu0.b32.cont [12/16] %v185, 128
        %202 = vxpose.xlu0.b32.cont [13/16] %v186, 128
        %203 = vxpose.xlu0.b32.cont [14/16] %v187, 128
        %204 = vxpose.xlu0.b32.cont [15/16] %v188, 128
        %205 = vxpose.xlu0.b32.end [16/16] %v189, 128
        %v206 = vpop.trf.xlu0
        %v207 = vpop.trf.xlu0
        %v208 = vpop.trf.xlu0
        %v209 = vpop.trf.xlu0
        %v210 = vpop.trf.xlu0
        %v211 = vpop.trf.xlu0
        %v212 = vpop.trf.xlu0
        %v213 = vpop.trf.xlu0
        %v214 = vpop.trf.xlu0
        %v215 = vpop.trf.xlu0
        %v216 = vpop.trf.xlu0
        %v217 = vpop.trf.xlu0
        %v218 = vpop.trf.xlu0
        %v219 = vpop.trf.xlu0
        %v220 = vpop.trf.xlu0
        %v221 = vpop.trf.xlu0
        %222 = vst [vmem:[%s156] sm:$0xff] %v206
        %223 = vst [vmem:[%s156 + $0x8] sm:$0xff] %v207
        %224 = vst [vmem:[%s156 + $0x10] sm:$0xff] %v208
        %225 = vst [vmem:[%s156 + $0x18] sm:$0xff] %v209
        %226 = vst [vmem:[%s156 + $0x20] sm:$0xff] %v210
        %227 = vst [vmem:[%s156 + $0x28] sm:$0xff] %v211
        %228 = vst [vmem:[%s156 + $0x30] sm:$0xff] %v212
        %229 = vst [vmem:[%s156 + $0x38] sm:$0xff] %v213
        %230 = vst [vmem:[%s156 + $0x40] sm:$0xff] %v214
        %231 = vst [vmem:[%s156 + $0x48] sm:$0xff] %v215
        %232 = vst [vmem:[%s156 + $0x50] sm:$0xff] %v216
        %233 = vst [vmem:[%s156 + $0x58] sm:$0xff] %v217
        %234 = vst [vmem:[%s156 + $0x60] sm:$0xff] %v218
        %235 = vst [vmem:[%s156 + $0x68] sm:$0xff] %v219
        %236 = vst [vmem:[%s156 + $0x70] sm:$0xff] %v220
        %237 = vst [vmem:[%s156 + $0x78] sm:$0xff] %v221
        %v238 = vld [vmem:[%s170 + $0x8] sm:$0xff]
        %v239 = vld [vmem:[%s170 + $0x48] sm:$0xff]
        %v240 = vld [vmem:[%s170 + $0x88] sm:$0xff]
        %v241 = vld [vmem:[%s170 + $0xc8] sm:$0xff]
        %v242 = vld [vmem:[%s170 + $0x108] sm:$0xff]
        %v243 = vld [vmem:[%s170 + $0x148] sm:$0xff]
        %v244 = vld [vmem:[%s170 + $0x188] sm:$0xff]
        %v245 = vld [vmem:[%s170 + $0x1c8] sm:$0xff]
        %v246 = vld [vmem:[%s170 + $0x208] sm:$0xff]
        %v247 = vld [vmem:[%s170 + $0x248] sm:$0xff]
        %v248 = vld [vmem:[%s170 + $0x288] sm:$0xff]
        %v249 = vld [vmem:[%s170 + $0x2c8] sm:$0xff]
        %v250 = vld [vmem:[%s170 + $0x308] sm:$0xff]
        %v251 = vld [vmem:[%s170 + $0x348] sm:$0xff]
        %v252 = vld [vmem:[%s170 + $0x388] sm:$0xff]
        %v253 = vld [vmem:[%s170 + $0x3c8] sm:$0xff]
        %254 = vxpose.xlu0.b32.start [1/16] %v238, 128
        %255 = vxpose.xlu0.b32.cont [2/16] %v239, 128
        %256 = vxpose.xlu0.b32.cont [3/16] %v240, 128
        %257 = vxpose.xlu0.b32.cont [4/16] %v241, 128
        %258 = vxpose.xlu0.b32.cont [5/16] %v242, 128
        %259 = vxpose.xlu0.b32.cont [6/16] %v243, 128
        %260 = vxpose.xlu0.b32.cont [7/16] %v244, 128
        %261 = vxpose.xlu0.b32.cont [8/16] %v245, 128
        %262 = vxpose.xlu0.b32.cont [9/16] %v246, 128
        %263 = vxpose.xlu0.b32.cont [10/16] %v247, 128
        %264 = vxpose.xlu0.b32.cont [11/16] %v248, 128
        %265 = vxpose.xlu0.b32.cont [12/16] %v249, 128
        %266 = vxpose.xlu0.b32.cont [13/16] %v250, 128
        %267 = vxpose.xlu0.b32.cont [14/16] %v251, 128
        %268 = vxpose.xlu0.b32.cont [15/16] %v252, 128
        %269 = vxpose.xlu0.b32.end [16/16] %v253, 128
        %v270 = vpop.trf.xlu0
        %v271 = vpop.trf.xlu0
        %v272 = vpop.trf.xlu0
        %v273 = vpop.trf.xlu0
        %v274 = vpop.trf.xlu0
        %v275 = vpop.trf.xlu0
        %v276 = vpop.trf.xlu0
        %v277 = vpop.trf.xlu0
        %v278 = vpop.trf.xlu0
        %v279 = vpop.trf.xlu0
        %v280 = vpop.trf.xlu0
        %v281 = vpop.trf.xlu0
        %v282 = vpop.trf.xlu0
        %v283 = vpop.trf.xlu0
        %v284 = vpop.trf.xlu0
        %v285 = vpop.trf.xlu0
        %286 = vst [vmem:[%s156 + $0x80] sm:$0xff] %v270
        %287 = vst [vmem:[%s156 + $0x88] sm:$0xff] %v271
        %288 = vst [vmem:[%s156 + $0x90] sm:$0xff] %v272
        %289 = vst [vmem:[%s156 + $0x98] sm:$0xff] %v273
        %290 = vst [vmem:[%s156 + $0xa0] sm:$0xff] %v274
        %291 = vst [vmem:[%s156 + $0xa8] sm:$0xff] %v275
        %292 = vst [vmem:[%s156 + $0xb0] sm:$0xff] %v276
        %293 = vst [vmem:[%s156 + $0xb8] sm:$0xff] %v277
        %294 = vst [vmem:[%s156 + $0xc0] sm:$0xff] %v278
        %295 = vst [vmem:[%s156 + $0xc8] sm:$0xff] %v279
        %296 = vst [vmem:[%s156 + $0xd0] sm:$0xff] %v280
        %297 = vst [vmem:[%s156 + $0xd8] sm:$0xff] %v281
        %298 = vst [vmem:[%s156 + $0xe0] sm:$0xff] %v282
        %299 = vst [vmem:[%s156 + $0xe8] sm:$0xff] %v283
        %300 = vst [vmem:[%s156 + $0xf0] sm:$0xff] %v284
        %301 = vst [vmem:[%s156 + $0xf8] sm:$0xff] %v285
        %v302 = vld [vmem:[%s170 + $0x10] sm:$0xff]
        %v303 = vld [vmem:[%s170 + $0x50] sm:$0xff]
        %v304 = vld [vmem:[%s170 + $0x90] sm:$0xff]
        %v305 = vld [vmem:[%s170 + $0xd0] sm:$0xff]
        %v306 = vld [vmem:[%s170 + $0x110] sm:$0xff]
        %v307 = vld [vmem:[%s170 + $0x150] sm:$0xff]
        %v308 = vld [vmem:[%s170 + $0x190] sm:$0xff]
        %v309 = vld [vmem:[%s170 + $0x1d0] sm:$0xff]
        %v310 = vld [vmem:[%s170 + $0x210] sm:$0xff]
        %v311 = vld [vmem:[%s170 + $0x250] sm:$0xff]
        %v312 = vld [vmem:[%s170 + $0x290] sm:$0xff]
        %v313 = vld [vmem:[%s170 + $0x2d0] sm:$0xff]
        %v314 = vld [vmem:[%s170 + $0x310] sm:$0xff]
        %v315 = vld [vmem:[%s170 + $0x350] sm:$0xff]
        %v316 = vld [vmem:[%s170 + $0x390] sm:$0xff]
        %v317 = vld [vmem:[%s170 + $0x3d0] sm:$0xff]
        %318 = vxpose.xlu0.b32.start [1/16] %v302, 128
        %319 = vxpose.xlu0.b32.cont [2/16] %v303, 128
        %320 = vxpose.xlu0.b32.cont [3/16] %v304, 128
        %321 = vxpose.xlu0.b32.cont [4/16] %v305, 128
        %322 = vxpose.xlu0.b32.cont [5/16] %v306, 128
        %323 = vxpose.xlu0.b32.cont [6/16] %v307, 128
        %324 = vxpose.xlu0.b32.cont [7/16] %v308, 128
        %325 = vxpose.xlu0.b32.cont [8/16] %v309, 128
        %326 = vxpose.xlu0.b32.cont [9/16] %v310, 128
        %327 = vxpose.xlu0.b32.cont [10/16] %v311, 128
        %328 = vxpose.xlu0.b32.cont [11/16] %v312, 128
        %329 = vxpose.xlu0.b32.cont [12/16] %v313, 128
        %330 = vxpose.xlu0.b32.cont [13/16] %v314, 128
        %331 = vxpose.xlu0.b32.cont [14/16] %v315, 128
        %332 = vxpose.xlu0.b32.cont [15/16] %v316, 128
        %333 = vxpose.xlu0.b32.end [16/16] %v317, 128
        %v334 = vpop.trf.xlu0
        %v335 = vpop.trf.xlu0
        %v336 = vpop.trf.xlu0
        %v337 = vpop.trf.xlu0
        %v338 = vpop.trf.xlu0
        %v339 = vpop.trf.xlu0
        %v340 = vpop.trf.xlu0
        %v341 = vpop.trf.xlu0
        %v342 = vpop.trf.xlu0
        %v343 = vpop.trf.xlu0
        %v344 = vpop.trf.xlu0
        %v345 = vpop.trf.xlu0
        %v346 = vpop.trf.xlu0
        %v347 = vpop.trf.xlu0
        %v348 = vpop.trf.xlu0
        %v349 = vpop.trf.xlu0
        %350 = vst [vmem:[%s156 + $0x100] sm:$0xff] %v334
        %351 = vst [vmem:[%s156 + $0x108] sm:$0xff] %v335
        %352 = vst [vmem:[%s156 + $0x110] sm:$0xff] %v336
        %353 = vst [vmem:[%s156 + $0x118] sm:$0xff] %v337
        %354 = vst [vmem:[%s156 + $0x120] sm:$0xff] %v338
        %355 = vst [vmem:[%s156 + $0x128] sm:$0xff] %v339
        %356 = vst [vmem:[%s156 + $0x130] sm:$0xff] %v340
        %357 = vst [vmem:[%s156 + $0x138] sm:$0xff] %v341
        %358 = vst [vmem:[%s156 + $0x140] sm:$0xff] %v342
        %359 = vst [vmem:[%s156 + $0x148] sm:$0xff] %v343
        %360 = vst [vmem:[%s156 + $0x150] sm:$0xff] %v344
        %361 = vst [vmem:[%s156 + $0x158] sm:$0xff] %v345
        %362 = vst [vmem:[%s156 + $0x160] sm:$0xff] %v346
        %363 = vst [vmem:[%s156 + $0x168] sm:$0xff] %v347
        %364 = vst [vmem:[%s156 + $0x170] sm:$0xff] %v348
        %365 = vst [vmem:[%s156 + $0x178] sm:$0xff] %v349
        %v366 = vld [vmem:[%s170 + $0x18] sm:$0xff]
        %v367 = vld [vmem:[%s170 + $0x58] sm:$0xff]
        %v368 = vld [vmem:[%s170 + $0x98] sm:$0xff]
        %v369 = vld [vmem:[%s170 + $0xd8] sm:$0xff]
        %v370 = vld [vmem:[%s170 + $0x118] sm:$0xff]
        %v371 = vld [vmem:[%s170 + $0x158] sm:$0xff]
        %v372 = vld [vmem:[%s170 + $0x198] sm:$0xff]
        %v373 = vld [vmem:[%s170 + $0x1d8] sm:$0xff]
        %v374 = vld [vmem:[%s170 + $0x218] sm:$0xff]
        %v375 = vld [vmem:[%s170 + $0x258] sm:$0xff]
        %v376 = vld [vmem:[%s170 + $0x298] sm:$0xff]
        %v377 = vld [vmem:[%s170 + $0x2d8] sm:$0xff]
        %v378 = vld [vmem:[%s170 + $0x318] sm:$0xff]
        %v379 = vld [vmem:[%s170 + $0x358] sm:$0xff]
        %v380 = vld [vmem:[%s170 + $0x398] sm:$0xff]
        %v381 = vld [vmem:[%s170 + $0x3d8] sm:$0xff]
        %382 = vxpose.xlu0.b32.start [1/16] %v366, 128
        %383 = vxpose.xlu0.b32.cont [2/16] %v367, 128
        %384 = vxpose.xlu0.b32.cont [3/16] %v368, 128
        %385 = vxpose.xlu0.b32.cont [4/16] %v369, 128
        %386 = vxpose.xlu0.b32.cont [5/16] %v370, 128
        %387 = vxpose.xlu0.b32.cont [6/16] %v371, 128
        %388 = vxpose.xlu0.b32.cont [7/16] %v372, 128
        %389 = vxpose.xlu0.b32.cont [8/16] %v373, 128
        %390 = vxpose.xlu0.b32.cont [9/16] %v374, 128
        %391 = vxpose.xlu0.b32.cont [10/16] %v375, 128
        %392 = vxpose.xlu0.b32.cont [11/16] %v376, 128
        %393 = vxpose.xlu0.b32.cont [12/16] %v377, 128
        %394 = vxpose.xlu0.b32.cont [13/16] %v378, 128
        %395 = vxpose.xlu0.b32.cont [14/16] %v379, 128
        %396 = vxpose.xlu0.b32.cont [15/16] %v380, 128
        %397 = vxpose.xlu0.b32.end [16/16] %v381, 128
        %v398 = vpop.trf.xlu0
        %v399 = vpop.trf.xlu0
        %v400 = vpop.trf.xlu0
        %v401 = vpop.trf.xlu0
        %v402 = vpop.trf.xlu0
        %v403 = vpop.trf.xlu0
        %v404 = vpop.trf.xlu0
        %v405 = vpop.trf.xlu0
        %v406 = vpop.trf.xlu0
        %v407 = vpop.trf.xlu0
        %v408 = vpop.trf.xlu0
        %v409 = vpop.trf.xlu0
        %v410 = vpop.trf.xlu0
        %v411 = vpop.trf.xlu0
        %v412 = vpop.trf.xlu0
        %v413 = vpop.trf.xlu0
        %414 = vst [vmem:[%s156 + $0x180] sm:$0xff] %v398
        %415 = vst [vmem:[%s156 + $0x188] sm:$0xff] %v399
        %416 = vst [vmem:[%s156 + $0x190] sm:$0xff] %v400
        %417 = vst [vmem:[%s156 + $0x198] sm:$0xff] %v401
        %418 = vst [vmem:[%s156 + $0x1a0] sm:$0xff] %v402
        %419 = vst [vmem:[%s156 + $0x1a8] sm:$0xff] %v403
        %420 = vst [vmem:[%s156 + $0x1b0] sm:$0xff] %v404
        %421 = vst [vmem:[%s156 + $0x1b8] sm:$0xff] %v405
        %422 = vst [vmem:[%s156 + $0x1c0] sm:$0xff] %v406
        %423 = vst [vmem:[%s156 + $0x1c8] sm:$0xff] %v407
        %424 = vst [vmem:[%s156 + $0x1d0] sm:$0xff] %v408
        %425 = vst [vmem:[%s156 + $0x1d8] sm:$0xff] %v409
        %426 = vst [vmem:[%s156 + $0x1e0] sm:$0xff] %v410
        %427 = vst [vmem:[%s156 + $0x1e8] sm:$0xff] %v411
        %428 = vst [vmem:[%s156 + $0x1f0] sm:$0xff] %v412
        %429 = vst [vmem:[%s156 + $0x1f8] sm:$0xff] %v413
        %v430 = vld [vmem:[%s170 + $0x20] sm:$0xff]
        %v431 = vld [vmem:[%s170 + $0x60] sm:$0xff]
        %v432 = vld [vmem:[%s170 + $0xa0] sm:$0xff]
        %v433 = vld [vmem:[%s170 + $0xe0] sm:$0xff]
        %v434 = vld [vmem:[%s170 + $0x120] sm:$0xff]
        %v435 = vld [vmem:[%s170 + $0x160] sm:$0xff]
        %v436 = vld [vmem:[%s170 + $0x1a0] sm:$0xff]
        %v437 = vld [vmem:[%s170 + $0x1e0] sm:$0xff]
        %v438 = vld [vmem:[%s170 + $0x220] sm:$0xff]
        %v439 = vld [vmem:[%s170 + $0x260] sm:$0xff]
        %v440 = vld [vmem:[%s170 + $0x2a0] sm:$0xff]
        %v441 = vld [vmem:[%s170 + $0x2e0] sm:$0xff]
        %v442 = vld [vmem:[%s170 + $0x320] sm:$0xff]
        %v443 = vld [vmem:[%s170 + $0x360] sm:$0xff]
        %v444 = vld [vmem:[%s170 + $0x3a0] sm:$0xff]
        %v445 = vld [vmem:[%s170 + $0x3e0] sm:$0xff]
        %446 = vxpose.xlu0.b32.start [1/16] %v430, 128
        %447 = vxpose.xlu0.b32.cont [2/16] %v431, 128
        %448 = vxpose.xlu0.b32.cont [3/16] %v432, 128
        %449 = vxpose.xlu0.b32.cont [4/16] %v433, 128
        %450 = vxpose.xlu0.b32.cont [5/16] %v434, 128
        %451 = vxpose.xlu0.b32.cont [6/16] %v435, 128
        %452 = vxpose.xlu0.b32.cont [7/16] %v436, 128
        %453 = vxpose.xlu0.b32.cont [8/16] %v437, 128
        %454 = vxpose.xlu0.b32.cont [9/16] %v438, 128
        %455 = vxpose.xlu0.b32.cont [10/16] %v439, 128
        %456 = vxpose.xlu0.b32.cont [11/16] %v440, 128
        %457 = vxpose.xlu0.b32.cont [12/16] %v441, 128
        %458 = vxpose.xlu0.b32.cont [13/16] %v442, 128
        %459 = vxpose.xlu0.b32.cont [14/16] %v443, 128
        %460 = vxpose.xlu0.b32.cont [15/16] %v444, 128
        %461 = vxpose.xlu0.b32.end [16/16] %v445, 128
        %v462 = vpop.trf.xlu0
        %v463 = vpop.trf.xlu0
        %v464 = vpop.trf.xlu0
        %v465 = vpop.trf.xlu0
        %v466 = vpop.trf.xlu0
        %v467 = vpop.trf.xlu0
        %v468 = vpop.trf.xlu0
        %v469 = vpop.trf.xlu0
        %v470 = vpop.trf.xlu0
        %v471 = vpop.trf.xlu0
        %v472 = vpop.trf.xlu0
        %v473 = vpop.trf.xlu0
        %v474 = vpop.trf.xlu0
        %v475 = vpop.trf.xlu0
        %v476 = vpop.trf.xlu0
        %v477 = vpop.trf.xlu0
        %478 = vst [vmem:[%s156 + $0x200] sm:$0xff] %v462
        %479 = vst [vmem:[%s156 + $0x208] sm:$0xff] %v463
        %480 = vst [vmem:[%s156 + $0x210] sm:$0xff] %v464
        %481 = vst [vmem:[%s156 + $0x218] sm:$0xff] %v465
        %482 = vst [vmem:[%s156 + $0x220] sm:$0xff] %v466
        %483 = vst [vmem:[%s156 + $0x228] sm:$0xff] %v467
        %484 = vst [vmem:[%s156 + $0x230] sm:$0xff] %v468
        %485 = vst [vmem:[%s156 + $0x238] sm:$0xff] %v469
        %486 = vst [vmem:[%s156 + $0x240] sm:$0xff] %v470
        %487 = vst [vmem:[%s156 + $0x248] sm:$0xff] %v471
        %488 = vst [vmem:[%s156 + $0x250] sm:$0xff] %v472
        %489 = vst [vmem:[%s156 + $0x258] sm:$0xff] %v473
        %490 = vst [vmem:[%s156 + $0x260] sm:$0xff] %v474
        %491 = vst [vmem:[%s156 + $0x268] sm:$0xff] %v475
        %492 = vst [vmem:[%s156 + $0x270] sm:$0xff] %v476
        %493 = vst [vmem:[%s156 + $0x278] sm:$0xff] %v477
        %v494 = vld [vmem:[%s170 + $0x28] sm:$0xff]
        %v495 = vld [vmem:[%s170 + $0x68] sm:$0xff]
        %v496 = vld [vmem:[%s170 + $0xa8] sm:$0xff]
        %v497 = vld [vmem:[%s170 + $0xe8] sm:$0xff]
        %v498 = vld [vmem:[%s170 + $0x128] sm:$0xff]
        %v499 = vld [vmem:[%s170 + $0x168] sm:$0xff]
        %v500 = vld [vmem:[%s170 + $0x1a8] sm:$0xff]
        %v501 = vld [vmem:[%s170 + $0x1e8] sm:$0xff]
        %v502 = vld [vmem:[%s170 + $0x228] sm:$0xff]
        %v503 = vld [vmem:[%s170 + $0x268] sm:$0xff]
        %v504 = vld [vmem:[%s170 + $0x2a8] sm:$0xff]
        %v505 = vld [vmem:[%s170 + $0x2e8] sm:$0xff]
        %v506 = vld [vmem:[%s170 + $0x328] sm:$0xff]
        %v507 = vld [vmem:[%s170 + $0x368] sm:$0xff]
        %v508 = vld [vmem:[%s170 + $0x3a8] sm:$0xff]
        %v509 = vld [vmem:[%s170 + $0x3e8] sm:$0xff]
        %510 = vxpose.xlu0.b32.start [1/16] %v494, 128
        %511 = vxpose.xlu0.b32.cont [2/16] %v495, 128
        %512 = vxpose.xlu0.b32.cont [3/16] %v496, 128
        %513 = vxpose.xlu0.b32.cont [4/16] %v497, 128
        %514 = vxpose.xlu0.b32.cont [5/16] %v498, 128
        %515 = vxpose.xlu0.b32.cont [6/16] %v499, 128
        %516 = vxpose.xlu0.b32.cont [7/16] %v500, 128
        %517 = vxpose.xlu0.b32.cont [8/16] %v501, 128
        %518 = vxpose.xlu0.b32.cont [9/16] %v502, 128
        %519 = vxpose.xlu0.b32.cont [10/16] %v503, 128
        %520 = vxpose.xlu0.b32.cont [11/16] %v504, 128
        %521 = vxpose.xlu0.b32.cont [12/16] %v505, 128
        %522 = vxpose.xlu0.b32.cont [13/16] %v506, 128
        %523 = vxpose.xlu0.b32.cont [14/16] %v507, 128
        %524 = vxpose.xlu0.b32.cont [15/16] %v508, 128
        %525 = vxpose.xlu0.b32.end [16/16] %v509, 128
        %v526 = vpop.trf.xlu0
        %v527 = vpop.trf.xlu0
        %v528 = vpop.trf.xlu0
        %v529 = vpop.trf.xlu0
        %v530 = vpop.trf.xlu0
        %v531 = vpop.trf.xlu0
        %v532 = vpop.trf.xlu0
        %v533 = vpop.trf.xlu0
        %v534 = vpop.trf.xlu0
        %v535 = vpop.trf.xlu0
        %v536 = vpop.trf.xlu0
        %v537 = vpop.trf.xlu0
        %v538 = vpop.trf.xlu0
        %v539 = vpop.trf.xlu0
        %v540 = vpop.trf.xlu0
        %v541 = vpop.trf.xlu0
        %542 = vst [vmem:[%s156 + $0x280] sm:$0xff] %v526
        %543 = vst [vmem:[%s156 + $0x288] sm:$0xff] %v527
        %544 = vst [vmem:[%s156 + $0x290] sm:$0xff] %v528
        %545 = vst [vmem:[%s156 + $0x298] sm:$0xff] %v529
        %546 = vst [vmem:[%s156 + $0x2a0] sm:$0xff] %v530
        %547 = vst [vmem:[%s156 + $0x2a8] sm:$0xff] %v531
        %548 = vst [vmem:[%s156 + $0x2b0] sm:$0xff] %v532
        %549 = vst [vmem:[%s156 + $0x2b8] sm:$0xff] %v533
        %550 = vst [vmem:[%s156 + $0x2c0] sm:$0xff] %v534
        %551 = vst [vmem:[%s156 + $0x2c8] sm:$0xff] %v535
        %552 = vst [vmem:[%s156 + $0x2d0] sm:$0xff] %v536
        %553 = vst [vmem:[%s156 + $0x2d8] sm:$0xff] %v537
        %554 = vst [vmem:[%s156 + $0x2e0] sm:$0xff] %v538
        %555 = vst [vmem:[%s156 + $0x2e8] sm:$0xff] %v539
        %556 = vst [vmem:[%s156 + $0x2f0] sm:$0xff] %v540
        %557 = vst [vmem:[%s156 + $0x2f8] sm:$0xff] %v541
        %v558 = vld [vmem:[%s170 + $0x30] sm:$0xff]
        %v559 = vld [vmem:[%s170 + $0x70] sm:$0xff]
        %v560 = vld [vmem:[%s170 + $0xb0] sm:$0xff]
        %v561 = vld [vmem:[%s170 + $0xf0] sm:$0xff]
        %v562 = vld [vmem:[%s170 + $0x130] sm:$0xff]
        %v563 = vld [vmem:[%s170 + $0x170] sm:$0xff]
        %v564 = vld [vmem:[%s170 + $0x1b0] sm:$0xff]
        %v565 = vld [vmem:[%s170 + $0x1f0] sm:$0xff]
        %v566 = vld [vmem:[%s170 + $0x230] sm:$0xff]
        %v567 = vld [vmem:[%s170 + $0x270] sm:$0xff]
        %v568 = vld [vmem:[%s170 + $0x2b0] sm:$0xff]
        %v569 = vld [vmem:[%s170 + $0x2f0] sm:$0xff]
        %v570 = vld [vmem:[%s170 + $0x330] sm:$0xff]
        %v571 = vld [vmem:[%s170 + $0x370] sm:$0xff]
        %v572 = vld [vmem:[%s170 + $0x3b0] sm:$0xff]
        %v573 = vld [vmem:[%s170 + $0x3f0] sm:$0xff]
        %574 = vxpose.xlu0.b32.start [1/16] %v558, 128
        %575 = vxpose.xlu0.b32.cont [2/16] %v559, 128
        %576 = vxpose.xlu0.b32.cont [3/16] %v560, 128
        %577 = vxpose.xlu0.b32.cont [4/16] %v561, 128
        %578 = vxpose.xlu0.b32.cont [5/16] %v562, 128
        %579 = vxpose.xlu0.b32.cont [6/16] %v563, 128
        %580 = vxpose.xlu0.b32.cont [7/16] %v564, 128
        %581 = vxpose.xlu0.b32.cont [8/16] %v565, 128
        %582 = vxpose.xlu0.b32.cont [9/16] %v566, 128
        %583 = vxpose.xlu0.b32.cont [10/16] %v567, 128
        %584 = vxpose.xlu0.b32.cont [11/16] %v568, 128
        %585 = vxpose.xlu0.b32.cont [12/16] %v569, 128
        %586 = vxpose.xlu0.b32.cont [13/16] %v570, 128
        %587 = vxpose.xlu0.b32.cont [14/16] %v571, 128
        %588 = vxpose.xlu0.b32.cont [15/16] %v572, 128
        %589 = vxpose.xlu0.b32.end [16/16] %v573, 128
        %v590 = vpop.trf.xlu0
        %v591 = vpop.trf.xlu0
        %v592 = vpop.trf.xlu0
        %v593 = vpop.trf.xlu0
        %v594 = vpop.trf.xlu0
        %v595 = vpop.trf.xlu0
        %v596 = vpop.trf.xlu0
        %v597 = vpop.trf.xlu0
        %v598 = vpop.trf.xlu0
        %v599 = vpop.trf.xlu0
        %v600 = vpop.trf.xlu0
        %v601 = vpop.trf.xlu0
        %v602 = vpop.trf.xlu0
        %v603 = vpop.trf.xlu0
        %v604 = vpop.trf.xlu0
        %v605 = vpop.trf.xlu0
        %606 = vst [vmem:[%s156 + $0x300] sm:$0xff] %v590
        %607 = vst [vmem:[%s156 + $0x308] sm:$0xff] %v591
        %608 = vst [vmem:[%s156 + $0x310] sm:$0xff] %v592
        %609 = vst [vmem:[%s156 + $0x318] sm:$0xff] %v593
        %610 = vst [vmem:[%s156 + $0x320] sm:$0xff] %v594
        %611 = vst [vmem:[%s156 + $0x328] sm:$0xff] %v595
        %612 = vst [vmem:[%s156 + $0x330] sm:$0xff] %v596
        %613 = vst [vmem:[%s156 + $0x338] sm:$0xff] %v597
        %614 = vst [vmem:[%s156 + $0x340] sm:$0xff] %v598
        %615 = vst [vmem:[%s156 + $0x348] sm:$0xff] %v599
        %616 = vst [vmem:[%s156 + $0x350] sm:$0xff] %v600
        %617 = vst [vmem:[%s156 + $0x358] sm:$0xff] %v601
        %618 = vst [vmem:[%s156 + $0x360] sm:$0xff] %v602
        %619 = vst [vmem:[%s156 + $0x368] sm:$0xff] %v603
        %620 = vst [vmem:[%s156 + $0x370] sm:$0xff] %v604
        %621 = vst [vmem:[%s156 + $0x378] sm:$0xff] %v605
        %v622 = vld [vmem:[%s170 + $0x38] sm:$0xff]
        %v623 = vld [vmem:[%s170 + $0x78] sm:$0xff]
        %v624 = vld [vmem:[%s170 + $0xb8] sm:$0xff]
        %v625 = vld [vmem:[%s170 + $0xf8] sm:$0xff]
        %v626 = vld [vmem:[%s170 + $0x138] sm:$0xff]
        %v627 = vld [vmem:[%s170 + $0x178] sm:$0xff]
        %v628 = vld [vmem:[%s170 + $0x1b8] sm:$0xff]
        %v629 = vld [vmem:[%s170 + $0x1f8] sm:$0xff]
        %v630 = vld [vmem:[%s170 + $0x238] sm:$0xff]
        %v631 = vld [vmem:[%s170 + $0x278] sm:$0xff]
        %v632 = vld [vmem:[%s170 + $0x2b8] sm:$0xff]
        %v633 = vld [vmem:[%s170 + $0x2f8] sm:$0xff]
        %v634 = vld [vmem:[%s170 + $0x338] sm:$0xff]
        %v635 = vld [vmem:[%s170 + $0x378] sm:$0xff]
        %v636 = vld [vmem:[%s170 + $0x3b8] sm:$0xff]
        %v637 = vld [vmem:[%s170 + $0x3f8] sm:$0xff]
        %638 = vxpose.xlu0.b32.start [1/16] %v622, 128
        %639 = vxpose.xlu0.b32.cont [2/16] %v623, 128
        %640 = vxpose.xlu0.b32.cont [3/16] %v624, 128
        %641 = vxpose.xlu0.b32.cont [4/16] %v625, 128
        %642 = vxpose.xlu0.b32.cont [5/16] %v626, 128
        %643 = vxpose.xlu0.b32.cont [6/16] %v627, 128
        %644 = vxpose.xlu0.b32.cont [7/16] %v628, 128
        %645 = vxpose.xlu0.b32.cont [8/16] %v629, 128
        %646 = vxpose.xlu0.b32.cont [9/16] %v630, 128
        %647 = vxpose.xlu0.b32.cont [10/16] %v631, 128
        %648 = vxpose.xlu0.b32.cont [11/16] %v632, 128
        %649 = vxpose.xlu0.b32.cont [12/16] %v633, 128
        %650 = vxpose.xlu0.b32.cont [13/16] %v634, 128
        %651 = vxpose.xlu0.b32.cont [14/16] %v635, 128
        %652 = vxpose.xlu0.b32.cont [15/16] %v636, 128
        %653 = vxpose.xlu0.b32.end [16/16] %v637, 128
        %v654 = vpop.trf.xlu0
        %v655 = vpop.trf.xlu0
        %v656 = vpop.trf.xlu0
        %v657 = vpop.trf.xlu0
        %v658 = vpop.trf.xlu0
        %v659 = vpop.trf.xlu0
        %v660 = vpop.trf.xlu0
        %v661 = vpop.trf.xlu0
        %v662 = vpop.trf.xlu0
        %v663 = vpop.trf.xlu0
        %v664 = vpop.trf.xlu0
        %v665 = vpop.trf.xlu0
        %v666 = vpop.trf.xlu0
        %v667 = vpop.trf.xlu0
        %v668 = vpop.trf.xlu0
        %v669 = vpop.trf.xlu0
        %670 = vst [vmem:[%s156 + $0x380] sm:$0xff] %v654
        %671 = vst [vmem:[%s156 + $0x388] sm:$0xff] %v655
        %672 = vst [vmem:[%s156 + $0x390] sm:$0xff] %v656
        %673 = vst [vmem:[%s156 + $0x398] sm:$0xff] %v657
        %674 = vst [vmem:[%s156 + $0x3a0] sm:$0xff] %v658
        %675 = vst [vmem:[%s156 + $0x3a8] sm:$0xff] %v659
        %676 = vst [vmem:[%s156 + $0x3b0] sm:$0xff] %v660
        %677 = vst [vmem:[%s156 + $0x3b8] sm:$0xff] %v661
        %678 = vst [vmem:[%s156 + $0x3c0] sm:$0xff] %v662
        %679 = vst [vmem:[%s156 + $0x3c8] sm:$0xff] %v663
        %680 = vst [vmem:[%s156 + $0x3d0] sm:$0xff] %v664
        %681 = vst [vmem:[%s156 + $0x3d8] sm:$0xff] %v665
        %682 = vst [vmem:[%s156 + $0x3e0] sm:$0xff] %v666
        %683 = vst [vmem:[%s156 + $0x3e8] sm:$0xff] %v667
        %684 = vst [vmem:[%s156 + $0x3f0] sm:$0xff] %v668
        %685 = vst [vmem:[%s156 + $0x3f8] sm:$0xff] %v669
        %s686 = sand.u32 %s76, 1
        %s687 = scalar_lea.sflag [#allocation3], %s686
        %s688 = sand.u32 %s76, 1
        %s689 = smul.addr %s688, 1024
        %s690 = scalar_lea.vmem [#allocation2], %s689
        // Predicated region
        $region25: #{feature2embedding.1} parent=23 // pred_check
          %p691 = pneg %p86
        $region26: #{feature2embedding.1} parent=23 // pred_check_branch
          %693 = sbr.rel (%p691) target = $region28
        $region27: #{feature2embedding.1} parent=23 // pred_region
          %s694 = smul.u32 128, %s21
          %s696 = ssub.s32 16384, 16384
          %697 = vsyncadd %s687, %s696
          %s698 = sadd.s32 %s22, %s694
          %s699 = smul.addr %s20, 128
          %s700 = sadd.s32 %s698, %s699
          %s701 = smul.addr %s700, 128
          %s702 = scalar_lea.hbm %s1, %s701
          %s703 = sshll.u32 %s690, 4
          %s704 = int_to_ptr.vmem [resolvable:$true] %s703
          %709 = dma.vmem_to_hbm [thread:$0]  %s704, 16384, %s702, %s687, 128, 128, 8
        $region28: #{feature2embedding.1} parent=23 // pred_fallthru
          _
      $region24: #{feature2embedding.1} parent=5 // pred_fallthru
        _
      %p710 = scmp.le.s32.totalorder 2, %s10
      // Predicated region
      $region29: #{feature2embedding.1} parent=5 // pred_check
        %p711 = pneg %p710
      $region30: #{feature2embedding.1} parent=5 // pred_check_branch
        %713 = sbr.rel (%p711) target = $region32
      $region31: #{feature2embedding.1} parent=5 // pred_region
        %s714 = ssub.s32 %s10, 2
        // Predicated region
        $region33: #{feature2embedding.1} parent=31 // pred_check
          %p715 = pneg %p92
        $region34: #{feature2embedding.1} parent=31 // pred_check_branch
          %717 = sbr.rel (%p715) target = $region36
        $region35: #{feature2embedding.1} parent=31 // pred_region
          %s718 = sand.u32 %s77, 1
          %s719 = scalar_lea.sflag [#allocation3], %s718
          %s720 = sand.u32 %s77, 1
          %s721 = smul.addr %s720, 1024
          %s722 = scalar_lea.vmem [#allocation2], %s721
          %723 = dma.done %s719, 16384
        $region36: #{feature2embedding.1} parent=31 // pred_fallthru
          _
      $region32: #{feature2embedding.1} parent=5 // pred_fallthru
        _
    $region6: #{feature2embedding.1} parent=1 // loop_footer
      %s14 = sadd.s32 1, %s10
    $region7: #{feature2embedding.1} parent=1 // loop_footer_branch
      %9 = sbr.rel target = $region3
    $region8: #{feature2embedding.1} parent=1 // loop_exit
      _
    %724 = vsyncpa [#allocation3], 1
    %s725 = scalar_lea.sflag [#allocation3], 1
    %726 = vsyncpa %s725, 1

</llo_original>
